<compile_context>
chip_gen: v7x
topology: tpu7x:2x2x1
jax: 0.10.0
libtpu: 0.0.40
codegen_flags: <defaults>
</compile_context>

<pallas_src>
import jax
import jax.numpy as jnp
from jax import lax
from jax.experimental import pallas as pl
from jax.experimental.pallas import tpu as pltpu


def _flash_causal_kernel(x_q_ref, x_kv_ref, wq_ref, wkv_ref, o_ref,
                         q_ref, m_ref, l_ref, acc_ref):
    # x_q_ref  : (bt, d_in)       query-tile slice of x (batch dim squeezed)
    # x_kv_ref : (bt, d_in)       kv-tile slice of x (clamped to <= q tile)
    # wq_ref   : (d_in, d_pad)    pre-scaled (1/sqrt(d_k)), zero-padded Wq^T
    # wkv_ref  : (d_in, 2*d_pad)  [Wk^T | Wv^T], zero-padded
    # o_ref    : (bt, d_pad)      lane-dense output tile
    # q_ref    : (bt, d_pad)      cached projected q tile (compute dtype)
    # m_ref/l_ref : (bt, 1) f32   online-softmax running max / sum
    # acc_ref  : (bt, d_pad) f32  running weighted-V accumulator
    qi = pl.program_id(1)
    ki = pl.program_id(2)
    d_pad = wq_ref.shape[1]

    @pl.when(ki == 0)
    def _init():
        # Project q once per (batch, q-tile); scale already folded into Wq.
        q = jnp.dot(x_q_ref[...], wq_ref[...],
                    preferred_element_type=jnp.float32)
        q_ref[...] = q.astype(q_ref.dtype)
        m_ref[...] = jnp.full_like(m_ref, -jnp.inf)
        l_ref[...] = jnp.zeros_like(l_ref)
        acc_ref[...] = jnp.zeros_like(acc_ref)

    @pl.when(ki <= qi)  # causal: skip fully-masked (upper-triangle) kv tiles
    def _compute():
        # Fused K/V projection for this kv tile: one wide MXU matmul.
        kv = jnp.dot(x_kv_ref[...], wkv_ref[...],
                     preferred_element_type=jnp.float32)
        k = kv[:, :d_pad].astype(q_ref.dtype)
        v = kv[:, d_pad:].astype(q_ref.dtype)

        # scores = q @ k^T without an explicit transpose (contract last dims).
        s = lax.dot_general(q_ref[...], k, (((1,), (1,)), ((), ())),
                            preferred_element_type=jnp.float32)  # (bq, bkv)

        def online_update(scores):
            m_prev = m_ref[...]
            m_new = jnp.maximum(m_prev, jnp.max(scores, axis=-1, keepdims=True))
            alpha = jnp.exp(m_prev - m_new)                  # f32 statistics
            p = jnp.exp(scores - m_new)
            l_ref[...] = alpha * l_ref[...] + jnp.sum(p, axis=-1, keepdims=True)
            acc_ref[...] = alpha * acc_ref[...] + jnp.dot(
                p.astype(v.dtype), v, preferred_element_type=jnp.float32)
            m_ref[...] = m_new

        @pl.when(ki == qi)  # diagonal block: apply the triangular mask
        def _diag():
            bq, bkv = s.shape
            row = lax.broadcasted_iota(jnp.int32, (bq, bkv), 0)
            col = lax.broadcasted_iota(jnp.int32, (bq, bkv), 1)
            online_update(jnp.where(col > row, -jnp.inf, s))

        @pl.when(ki < qi)   # strictly lower block: no masking work
        def _off_diag():
            online_update(s)

    @pl.when(ki == pl.num_programs(2) - 1)
    def _finalize():
        inv_l = pl.reciprocal(l_ref[...], approx=True)   # EUP vrcp, ~free
        o_ref[...] = (acc_ref[...] * inv_l).astype(o_ref.dtype)

    # TODO(synk): training-mode dropout on the attention weights would use
    # pltpu.prng_seed / pltpu.prng_random_bits; eval-mode dropout is identity.


def _choose_block(T, target):
    """Largest tile <= target that divides T and satisfies the sublane rule."""
    if T <= target:
        return T
    for b in range(target, 7, -1):
        if T % b == 0 and b % 8 == 0:
            return b
    return T  # fall back to whole sequence in one tile


def causal_attention(x, wq, wk, wv, *, block_t=128, compute_dtype=jnp.bfloat16):
    """x: (B, T, d_in); wq/wk/wv: torch-style (d_out, d_in). Returns (B, T, d_out) f32."""
    B, T, d_in = x.shape
    d_out = wq.shape[0]
    d_k = d_out                                   # torch: keys.shape[-1]

    # Lane-dense padded head dim (multiple of 128); padding columns are zero,
    # so scores and the valid output columns are unchanged.
    d_pad = ((d_out + 127) // 128) * 128
    scale = 1.0 / (d_k ** 0.5)

    f32 = jnp.float32
    wq_p = jnp.zeros((d_in, d_pad), f32).at[:, :d_out].set(wq.astype(f32).T * scale)
    wk_p = jnp.zeros((d_in, d_pad), f32).at[:, :d_out].set(wk.astype(f32).T)
    wv_p = jnp.zeros((d_in, d_pad), f32).at[:, :d_out].set(wv.astype(f32).T)
    wkv_p = jnp.concatenate([wk_p, wv_p], axis=1)            # (d_in, 2*d_pad)

    x_c = x.astype(compute_dtype)
    wq_c = wq_p.astype(compute_dtype)
    wkv_c = wkv_p.astype(compute_dtype)

    bt = _choose_block(T, block_t)
    nt = T // bt

    grid_spec = pltpu.PrefetchScalarGridSpec(
        num_scalar_prefetch=0,
        grid=(B, nt, nt),
        in_specs=[
            # x indexed by the q-tile (block index constant across ki -> no re-DMA)
            pl.BlockSpec((None, bt, d_in), lambda b, qi, ki: (b, qi, 0)),
            # x indexed by the kv-tile; clamp so skipped (masked) upper-triangle
            # steps never trigger a fresh DMA.
            pl.BlockSpec((None, bt, d_in),
                         lambda b, qi, ki: (b, jnp.minimum(ki, qi), 0)),
            pl.BlockSpec((d_in, d_pad), lambda b, qi, ki: (0, 0)),
            pl.BlockSpec((d_in, 2 * d_pad), lambda b, qi, ki: (0, 0)),
        ],
        out_specs=pl.BlockSpec((None, bt, d_pad),
                               lambda b, qi, ki: (b, qi, 0)),
        scratch_shapes=[
            pltpu.VMEM((bt, d_pad), compute_dtype),   # cached q tile
            pltpu.VMEM((bt, 1), jnp.float32),         # running max
            pltpu.VMEM((bt, 1), jnp.float32),         # running sum
            pltpu.VMEM((bt, d_pad), jnp.float32),     # accumulator
        ],
    )

    out = pl.pallas_call(
        _flash_causal_kernel,
        out_shape=jax.ShapeDtypeStruct((B, T, d_pad), jnp.float32),
        grid_spec=grid_spec,
        compiler_params=pltpu.CompilerParams(
            dimension_semantics=("parallel", "parallel", "arbitrary"),
        ),
    )(x_c, x_c, wq_c, wkv_c)

    return out[:, :, :d_out]


def _reference(x, wq, wk, wv):
    q = jnp.einsum("btd,od->bto", x, wq)
    k = jnp.einsum("btd,od->bto", x, wk)
    v = jnp.einsum("btd,od->bto", x, wv)
    scores = jnp.einsum("bto,bso->bts", q, k)
    T = x.shape[1]
    mask = jnp.triu(jnp.ones((T, T), dtype=bool), k=1)
    scores = jnp.where(mask[None], -jnp.inf, scores)
    w = jax.nn.softmax(scores / (wq.shape[0] ** 0.5), axis=-1)
    return jnp.einsum("bts,bso->bto", w, v)


if __name__ == "__main__":
    key = jax.random.PRNGKey(0)

    # --- Test 1: exact book-spec shapes (d_in=3, d_out=2, context_length=6) ---
    inputs = jnp.array([[0.43, 0.15, 0.89],
                        [0.55, 0.87, 0.66],
                        [0.57, 0.85, 0.64],
                        [0.22, 0.58, 0.33],
                        [0.77, 0.25, 0.10],
                        [0.05, 0.80, 0.55]], dtype=jnp.float32)
    batch = jnp.stack([inputs, inputs], axis=0)                 # (2, 6, 3)
    d_in, d_out = 3, 2
    k1, k2, k3, key = jax.random.split(key, 4)
    bound = 1.0 / (d_in ** 0.5)   # torch nn.Linear default init range
    wq1 = jax.random.uniform(k1, (d_out, d_in), minval=-bound, maxval=bound,
                             dtype=jnp.float32)
    wk1 = jax.random.uniform(k2, (d_out, d_in), minval=-bound, maxval=bound,
                             dtype=jnp.float32)
    wv1 = jax.random.uniform(k3, (d_out, d_in), minval=-bound, maxval=bound,
                             dtype=jnp.float32)

    out1 = jax.block_until_ready(causal_attention(batch, wq1, wk1, wv1))
    ref1 = _reference(batch, wq1, wk1, wv1)
    assert out1.shape == (2, 6, d_out)
    err1 = float(jnp.max(jnp.abs(out1 - ref1)))
    assert err1 < 2e-2, f"test1 mismatch vs reference, max abs err = {err1}"

    # --- Test 2: multi-tile flash path (exercises tile skip / diag mask) ------
    B, T, d_in, d_out = 2, 16, 32, 16
    kx, kq, kk, kv_ = jax.random.split(key, 4)
    x = jax.random.uniform(kx, (B, T, d_in), dtype=jnp.float32)
    bound = 1.0 / (d_in ** 0.5)
    wq2 = jax.random.uniform(kq, (d_out, d_in), minval=-bound, maxval=bound,
                             dtype=jnp.float32)
    wk2 = jax.random.uniform(kk, (d_out, d_in), minval=-bound, maxval=bound,
                             dtype=jnp.float32)
    wv2 = jax.random.uniform(kv_, (d_out, d_in), minval=-bound, maxval=bound,
                             dtype=jnp.float32)

    out2 = jax.block_until_ready(
        causal_attention(x, wq2, wk2, wv2, block_t=8))
    ref2 = _reference(x, wq2, wk2, wv2)
    assert out2.shape == (B, T, d_out)
    err2 = float(jnp.max(jnp.abs(out2 - ref2)))
    assert err2 < 2e-2, f"test2 mismatch vs reference, max abs err = {err2}"

    print("KERNEL_OK")
</pallas_src>

<mosaic_0001>
module attributes {stable_mosaic.version = 11 : i64} {
  func.func @_flash_causal_kernel(%arg0: i32, %arg1: i32, %arg2: i32, %arg3: memref<1x6x3xbf16, #tpu.memory_space<vmem>>, %arg4: memref<1x6x3xbf16, #tpu.memory_space<vmem>>, %arg5: memref<3x128xbf16, #tpu.memory_space<vmem>>, %arg6: memref<3x256xbf16, #tpu.memory_space<vmem>>, %arg7: memref<1x6x128xf32, #tpu.memory_space<vmem>>, %arg8: memref<6x128xbf16, #tpu.memory_space<vmem>>, %arg9: memref<6x1xf32, #tpu.memory_space<vmem>>, %arg10: memref<6x1xf32, #tpu.memory_space<vmem>>, %arg11: memref<6x128xf32, #tpu.memory_space<vmem>>) attributes {dimension_semantics = [#tpu.dimension_semantics<parallel>, #tpu.dimension_semantics<parallel>, #tpu.dimension_semantics<arbitrary>], iteration_bounds = array<i64: 2, 1, 1>, scalar_prefetch = 0 : i64, scratch_operands = 4 : i64, tpu.core_type = #tpu.core_type<tc>, window_params = [{transform_indices = @transform_0, window_bounds = array<i64: 1, 6, 3>}, {transform_indices = @transform_1, window_bounds = array<i64: 1, 6, 3>}, {pipeline_mode = #tpu.pipeline_mode<synchronous>, transform_indices = @transform_2, window_bounds = array<i64: 3, 128>}, {pipeline_mode = #tpu.pipeline_mode<synchronous>, transform_indices = @transform_3, window_bounds = array<i64: 3, 256>}, {transform_indices = @transform_4, window_bounds = array<i64: 1, 6, 128>}]} {
    %c0_i32 = arith.constant 0 : i32
    %0 = arith.cmpi eq, %arg2, %c0_i32 : i32
    %1 = arith.extui %0 : i1 to i32
    %c0_i32_0 = arith.constant 0 : i32
    %2 = arith.cmpi ne, %1, %c0_i32_0 : i32
    scf.if %2 {
      %c0 = arith.constant 0 : index
      %c0_4 = arith.constant 0 : index
      %c0_5 = arith.constant 0 : index
      %9 = vector.load %arg3[%c0, %c0_4, %c0_5] : memref<1x6x3xbf16, #tpu.memory_space<vmem>>, vector<1x6x3xbf16>
      %10 = vector.shape_cast %9 : vector<1x6x3xbf16> to vector<6x3xbf16>
      %c0_6 = arith.constant 0 : index
      %c0_7 = arith.constant 0 : index
      %11 = vector.load %arg5[%c0_6, %c0_7] : memref<3x128xbf16, #tpu.memory_space<vmem>>, vector<3x128xbf16>
      %cst = arith.constant dense<0.000000e+00> : vector<6x128xf32>
      %12 = tpu.matmul %10, %11, %cst {dimension_numbers = #tpu.dot_dimension_numbers<[1], [0], [0], [1], [0, 0, 1, 1], [], []>} : vector<6x3xbf16>, vector<3x128xbf16>, vector<6x128xf32> -> vector<6x128xf32>
      %13 = arith.truncf %12 : vector<6x128xf32> to vector<6x128xbf16>
      %c0_8 = arith.constant 0 : index
      %c0_9 = arith.constant 0 : index
      %14 = vector.load %arg8[%c0_8, %c0_9] : memref<6x128xbf16, #tpu.memory_space<vmem>>, vector<6x128xbf16>
      tpu.vector_store %arg8[%c0_8, %c0_9], %13 {strides = array<i32>} : memref<6x128xbf16, #tpu.memory_space<vmem>>, vector<6x128xbf16>,
      %cst_10 = arith.constant 0xFF800000 : f32
      %15 = vector.broadcast %cst_10 : f32 to vector<6x1xf32>
      %c0_11 = arith.constant 0 : index
      %c0_12 = arith.constant 0 : index
      %16 = vector.load %arg9[%c0_11, %c0_12] : memref<6x1xf32, #tpu.memory_space<vmem>>, vector<6x1xf32>
      tpu.vector_store %arg9[%c0_11, %c0_12], %15 {strides = array<i32>} : memref<6x1xf32, #tpu.memory_space<vmem>>, vector<6x1xf32>,
      %cst_13 = arith.constant 0.000000e+00 : f32
      %17 = vector.broadcast %cst_13 : f32 to vector<6x1xf32>
      %c0_14 = arith.constant 0 : index
      %c0_15 = arith.constant 0 : index
      %18 = vector.load %arg10[%c0_14, %c0_15] : memref<6x1xf32, #tpu.memory_space<vmem>>, vector<6x1xf32>
      tpu.vector_store %arg10[%c0_14, %c0_15], %17 {strides = array<i32>} : memref<6x1xf32, #tpu.memory_space<vmem>>, vector<6x1xf32>,
      %cst_16 = arith.constant 0.000000e+00 : f32
      %19 = vector.broadcast %cst_16 : f32 to vector<6x128xf32>
      %c0_17 = arith.constant 0 : index
      %c0_18 = arith.constant 0 : index
      %20 = vector.load %arg11[%c0_17, %c0_18] : memref<6x128xf32, #tpu.memory_space<vmem>>, vector<6x128xf32>
      tpu.vector_store %arg11[%c0_17, %c0_18], %19 {strides = array<i32>} : memref<6x128xf32, #tpu.memory_space<vmem>>, vector<6x128xf32>,
    } else {
    }
    %3 = arith.cmpi sle, %arg2, %arg1 : i32
    %4 = arith.extui %3 : i1 to i32
    %c0_i32_1 = arith.constant 0 : i32
    %5 = arith.cmpi ne, %4, %c0_i32_1 : i32
    scf.if %5 {
      %c0 = arith.constant 0 : index
      %c0_4 = arith.constant 0 : index
      %c0_5 = arith.constant 0 : index
      %9 = vector.load %arg4[%c0, %c0_4, %c0_5] : memref<1x6x3xbf16, #tpu.memory_space<vmem>>, vector<1x6x3xbf16>
      %10 = vector.shape_cast %9 : vector<1x6x3xbf16> to vector<6x3xbf16>
      %c0_6 = arith.constant 0 : index
      %c0_7 = arith.constant 0 : index
      %11 = vector.load %arg6[%c0_6, %c0_7] : memref<3x256xbf16, #tpu.memory_space<vmem>>, vector<3x256xbf16>
      %cst = arith.constant dense<0.000000e+00> : vector<6x256xf32>
      %12 = tpu.matmul %10, %11, %cst {dimension_numbers = #tpu.dot_dimension_numbers<[1], [0], [0], [1], [0, 0, 1, 1], [], []>} : vector<6x3xbf16>, vector<3x256xbf16>, vector<6x256xf32> -> vector<6x256xf32>
      %13 = vector.extract_strided_slice %12 {offsets = [0, 0], sizes = [6, 128], strides = [1, 1]} : vector<6x256xf32> to vector<6x128xf32>
      %14 = arith.truncf %13 : vector<6x128xf32> to vector<6x128xbf16>
      %15 = vector.extract_strided_slice %12 {offsets = [0, 128], sizes = [6, 128], strides = [1, 1]} : vector<6x256xf32> to vector<6x128xf32>
      %16 = arith.truncf %15 : vector<6x128xf32> to vector<6x128xbf16>
      %c0_8 = arith.constant 0 : index
      %c0_9 = arith.constant 0 : index
      %17 = vector.load %arg8[%c0_8, %c0_9] : memref<6x128xbf16, #tpu.memory_space<vmem>>, vector<6x128xbf16>
      %cst_10 = arith.constant dense<0.000000e+00> : vector<6x6xf32>
      %18 = tpu.matmul %17, %14, %cst_10 {dimension_numbers = #tpu.dot_dimension_numbers<[1], [1], [0], [0], [0, 0, 1, 0], [], []>} : vector<6x128xbf16>, vector<6x128xbf16>, vector<6x6xf32> -> vector<6x6xf32>
      %19 = arith.cmpi eq, %arg2, %arg1 : i32
      %20 = arith.extui %19 : i1 to i32
      %c0_i32_11 = arith.constant 0 : i32
      %21 = arith.cmpi ne, %20, %c0_i32_11 : i32
      scf.if %21 {
        %25 = tpu.iota {dimensions = array<i32: 0>} : vector<6x6xi32>
        %26 = tpu.iota {dimensions = array<i32: 1>} : vector<6x6xi32>
        %27 = arith.cmpi sgt, %26, %25 : vector<6x6xi32>
        %cst_13 = arith.constant 0xFF800000 : f32
        %28 = vector.broadcast %cst_13 : f32 to vector<6x6xf32>
        %29 = arith.select %27, %28, %18 : vector<6x6xi1>, vector<6x6xf32>
        %c0_14 = arith.constant 0 : index
        %c0_15 = arith.constant 0 : index
        %30 = vector.load %arg9[%c0_14, %c0_15] : memref<6x1xf32, #tpu.memory_space<vmem>>, vector<6x1xf32>
        %cst_16 = arith.constant dense<0xFF800000> : vector<6xf32>
        %31 = vector.multi_reduction <maximumf>, %29, %cst_16 [1] : vector<6x6xf32> to vector<6xf32>
        %32 = vector.shape_cast %31 : vector<6xf32> to vector<6x1xf32>
        %33 = arith.maximumf %30, %32 : vector<6x1xf32>
        %34 = arith.subf %30, %33 : vector<6x1xf32>
        %35 = math.exp %34 : vector<6x1xf32>
        %36 = vector.broadcast %33 : vector<6x1xf32> to vector<6x6xf32>
        %37 = arith.subf %29, %36 : vector<6x6xf32>
        %38 = math.exp %37 : vector<6x6xf32>
        %c0_17 = arith.constant 0 : index
        %c0_18 = arith.constant 0 : index
        %39 = vector.load %arg10[%c0_17, %c0_18] : memref<6x1xf32, #tpu.memory_space<vmem>>, vector<6x1xf32>
        %40 = arith.mulf %35, %39 : vector<6x1xf32>
        %cst_19 = arith.constant dense<0.000000e+00> : vector<6xf32>
        %41 = vector.multi_reduction <add>, %38, %cst_19 [1] : vector<6x6xf32> to vector<6xf32>
        %42 = vector.shape_cast %41 : vector<6xf32> to vector<6x1xf32>
        %43 = arith.addf %40, %42 : vector<6x1xf32>
        %c0_20 = arith.constant 0 : index
        %c0_21 = arith.constant 0 : index
        %44 = vector.load %arg10[%c0_20, %c0_21] : memref<6x1xf32, #tpu.memory_space<vmem>>, vector<6x1xf32>
        tpu.vector_store %arg10[%c0_20, %c0_21], %43 {strides = array<i32>} : memref<6x1xf32, #tpu.memory_space<vmem>>, vector<6x1xf32>,
        %c0_22 = arith.constant 0 : index
        %c0_23 = arith.constant 0 : index
        %45 = vector.load %arg11[%c0_22, %c0_23] : memref<6x128xf32, #tpu.memory_space<vmem>>, vector<6x128xf32>
        %46 = vector.broadcast %35 : vector<6x1xf32> to vector<6x128xf32>
        %47 = arith.mulf %46, %45 : vector<6x128xf32>
        %48 = arith.truncf %38 : vector<6x6xf32> to vector<6x6xbf16>
        %cst_24 = arith.constant dense<0.000000e+00> : vector<6x128xf32>
        %49 = tpu.matmul %48, %16, %cst_24 {dimension_numbers = #tpu.dot_dimension_numbers<[1], [0], [0], [1], [0, 0, 1, 1], [], []>} : vector<6x6xbf16>, vector<6x128xbf16>, vector<6x128xf32> -> vector<6x128xf32>
        %50 = arith.addf %47, %49 : vector<6x128xf32>
        %c0_25 = arith.constant 0 : index
        %c0_26 = arith.constant 0 : index
        %51 = vector.load %arg11[%c0_25, %c0_26] : memref<6x128xf32, #tpu.memory_space<vmem>>, vector<6x128xf32>
        tpu.vector_store %arg11[%c0_25, %c0_26], %50 {strides = array<i32>} : memref<6x128xf32, #tpu.memory_space<vmem>>, vector<6x128xf32>,
        %c0_27 = arith.constant 0 : index
        %c0_28 = arith.constant 0 : index
        %52 = vector.load %arg9[%c0_27, %c0_28] : memref<6x1xf32, #tpu.memory_space<vmem>>, vector<6x1xf32>
        tpu.vector_store %arg9[%c0_27, %c0_28], %33 {strides = array<i32>} : memref<6x1xf32, #tpu.memory_space<vmem>>, vector<6x1xf32>,
      } else {
      }
      %22 = arith.cmpi slt, %arg2, %arg1 : i32
      %23 = arith.extui %22 : i1 to i32
      %c0_i32_12 = arith.constant 0 : i32
      %24 = arith.cmpi ne, %23, %c0_i32_12 : i32
      scf.if %24 {
        %c0_13 = arith.constant 0 : index
        %c0_14 = arith.constant 0 : index
        %25 = vector.load %arg9[%c0_13, %c0_14] : memref<6x1xf32, #tpu.memory_space<vmem>>, vector<6x1xf32>
        %cst_15 = arith.constant dense<0xFF800000> : vector<6xf32>
        %26 = vector.multi_reduction <maximumf>, %18, %cst_15 [1] : vector<6x6xf32> to vector<6xf32>
        %27 = vector.shape_cast %26 : vector<6xf32> to vector<6x1xf32>
        %28 = arith.maximumf %25, %27 : vector<6x1xf32>
        %29 = arith.subf %25, %28 : vector<6x1xf32>
        %30 = math.exp %29 : vector<6x1xf32>
        %31 = vector.broadcast %28 : vector<6x1xf32> to vector<6x6xf32>
        %32 = arith.subf %18, %31 : vector<6x6xf32>
        %33 = math.exp %32 : vector<6x6xf32>
        %c0_16 = arith.constant 0 : index
        %c0_17 = arith.constant 0 : index
        %34 = vector.load %arg10[%c0_16, %c0_17] : memref<6x1xf32, #tpu.memory_space<vmem>>, vector<6x1xf32>
        %35 = arith.mulf %30, %34 : vector<6x1xf32>
        %cst_18 = arith.constant dense<0.000000e+00> : vector<6xf32>
        %36 = vector.multi_reduction <add>, %33, %cst_18 [1] : vector<6x6xf32> to vector<6xf32>
        %37 = vector.shape_cast %36 : vector<6xf32> to vector<6x1xf32>
        %38 = arith.addf %35, %37 : vector<6x1xf32>
        %c0_19 = arith.constant 0 : index
        %c0_20 = arith.constant 0 : index
        %39 = vector.load %arg10[%c0_19, %c0_20] : memref<6x1xf32, #tpu.memory_space<vmem>>, vector<6x1xf32>
        tpu.vector_store %arg10[%c0_19, %c0_20], %38 {strides = array<i32>} : memref<6x1xf32, #tpu.memory_space<vmem>>, vector<6x1xf32>,
        %c0_21 = arith.constant 0 : index
        %c0_22 = arith.constant 0 : index
        %40 = vector.load %arg11[%c0_21, %c0_22] : memref<6x128xf32, #tpu.memory_space<vmem>>, vector<6x128xf32>
        %41 = vector.broadcast %30 : vector<6x1xf32> to vector<6x128xf32>
        %42 = arith.mulf %41, %40 : vector<6x128xf32>
        %43 = arith.truncf %33 : vector<6x6xf32> to vector<6x6xbf16>
        %cst_23 = arith.constant dense<0.000000e+00> : vector<6x128xf32>
        %44 = tpu.matmul %43, %16, %cst_23 {dimension_numbers = #tpu.dot_dimension_numbers<[1], [0], [0], [1], [0, 0, 1, 1], [], []>} : vector<6x6xbf16>, vector<6x128xbf16>, vector<6x128xf32> -> vector<6x128xf32>
        %45 = arith.addf %42, %44 : vector<6x128xf32>
        %c0_24 = arith.constant 0 : index
        %c0_25 = arith.constant 0 : index
        %46 = vector.load %arg11[%c0_24, %c0_25] : memref<6x128xf32, #tpu.memory_space<vmem>>, vector<6x128xf32>
        tpu.vector_store %arg11[%c0_24, %c0_25], %45 {strides = array<i32>} : memref<6x128xf32, #tpu.memory_space<vmem>>, vector<6x128xf32>,
        %c0_26 = arith.constant 0 : index
        %c0_27 = arith.constant 0 : index
        %47 = vector.load %arg9[%c0_26, %c0_27] : memref<6x1xf32, #tpu.memory_space<vmem>>, vector<6x1xf32>
        tpu.vector_store %arg9[%c0_26, %c0_27], %28 {strides = array<i32>} : memref<6x1xf32, #tpu.memory_space<vmem>>, vector<6x1xf32>,
      } else {
      }
    } else {
    }
    %c0_i32_2 = arith.constant 0 : i32
    %6 = arith.cmpi eq, %arg2, %c0_i32_2 : i32
    %7 = arith.extui %6 : i1 to i32
    %c0_i32_3 = arith.constant 0 : i32
    %8 = arith.cmpi ne, %7, %c0_i32_3 : i32
    scf.if %8 {
      %c0 = arith.constant 0 : index
      %c0_4 = arith.constant 0 : index
      %9 = vector.load %arg10[%c0, %c0_4] : memref<6x1xf32, #tpu.memory_space<vmem>>, vector<6x1xf32>
      %10 = tpu.reciprocal %9 {approx = true} : vector<6x1xf32> -> vector<6x1xf32>
      %c0_5 = arith.constant 0 : index
      %c0_6 = arith.constant 0 : index
      %11 = vector.load %arg11[%c0_5, %c0_6] : memref<6x128xf32, #tpu.memory_space<vmem>>, vector<6x128xf32>
      %12 = vector.broadcast %10 : vector<6x1xf32> to vector<6x128xf32>
      %13 = arith.mulf %11, %12 : vector<6x128xf32>
      %c0_7 = arith.constant 0 : index
      %c0_8 = arith.constant 0 : index
      %c0_9 = arith.constant 0 : index
      %14 = vector.load %arg7[%c0_7, %c0_8, %c0_9] : memref<1x6x128xf32, #tpu.memory_space<vmem>>, vector<1x6x128xf32>
      %15 = vector.shape_cast %14 : vector<1x6x128xf32> to vector<6x128xf32>
      %16 = vector.shape_cast %13 : vector<6x128xf32> to vector<1x6x128xf32>
      tpu.vector_store %arg7[%c0_7, %c0_8, %c0_9], %16 {strides = array<i32>} : memref<1x6x128xf32, #tpu.memory_space<vmem>>, vector<1x6x128xf32>,
    } else {
    }
    return
  }
  func.func @transform_0(%arg0: i32, %arg1: i32, %arg2: i32) -> (i32, i32, i32) {
    %c0_i32 = arith.constant 0 : i32
    %c0_i32_0 = arith.constant 0 : i32
    return %arg0, %arg1, %c0_i32 : i32, i32, i32
  }
  func.func @transform_1(%arg0: i32, %arg1: i32, %arg2: i32) -> (i32, i32, i32) {
    %0 = arith.minsi %arg2, %arg1 : i32
    %c0_i32 = arith.constant 0 : i32
    %c0_i32_0 = arith.constant 0 : i32
    return %arg0, %0, %c0_i32 : i32, i32, i32
  }
  func.func @transform_2(%arg0: i32, %arg1: i32, %arg2: i32) -> (i32, i32) {
    %c0_i32 = arith.constant 0 : i32
    %c0_i32_0 = arith.constant 0 : i32
    %c0_i32_1 = arith.constant 0 : i32
    return %c0_i32, %c0_i32_0 : i32, i32
  }
  func.func @transform_3(%arg0: i32, %arg1: i32, %arg2: i32) -> (i32, i32) {
    %c0_i32 = arith.constant 0 : i32
    %c0_i32_0 = arith.constant 0 : i32
    %c0_i32_1 = arith.constant 0 : i32
    return %c0_i32, %c0_i32_0 : i32, i32
  }
  func.func @transform_4(%arg0: i32, %arg1: i32, %arg2: i32) -> (i32, i32, i32) {
    %c0_i32 = arith.constant 0 : i32
    %c0_i32_0 = arith.constant 0 : i32
    return %arg0, %arg1, %c0_i32 : i32, i32, i32
  }
}

</mosaic_0001>

<llo_original>
// kernel: tpu_custom_call.1
$region0: #{tpu_custom_call.1}
  #allocation0 [shape = 'u32[]', space=smem, size = 0x4, offset = 0x4, fixed_abs, tag = 'smem constant byte address 0x4 - core index']
  #allocation1 [shape = 'u32[144,128]{1,0:T(1,128)}', space=vmem, size = 0x12000, scoped, tag = 'internal scratch']
  #allocation2 [shape = 'bf16[6,128]{1,0:T(8,128)(2,1)}', space=vmem, size = 0x800, scoped, tag = 'scratch operand']
  #allocation3 [shape = 'f32[6,1]{1,0:T(8,128)}', space=vmem, size = 0x1000, scoped, tag = 'scratch operand']
  #allocation4 [shape = 'f32[6,1]{1,0:T(8,128)}', space=vmem, size = 0x1000, scoped, tag = 'scratch operand']
  #allocation5 [shape = 'f32[6,128]{1,0:T(8,128)}', space=vmem, size = 0x1000, scoped, tag = 'scratch operand']
  %s0 = inlined_call_operand.vmem [shape: bf16[2,6,3], index: 0, kind: input, shape index: {}]
  %s1 = inlined_call_operand.vmem [shape: bf16[2,6,3], index: 1, kind: input, shape index: {}]
  %s2 = inlined_call_operand.vmem [shape: bf16[3,128], index: 2, kind: input, shape index: {}]
  %s3 = inlined_call_operand.vmem [shape: bf16[3,256], index: 3, kind: input, shape index: {}]
  %s4 = inlined_call_operand.vmem [shape: f32[2,6,128], index: 4, kind: output, shape index: {}]
  %s5 = sld [smem:[#allocation0]]
  $region69: #{tpu_custom_call.1} parent=0
    _
  %s7 = ssub.s32 1, %s5
  %s8 = scalar_select 0, %s7, %s5
  loop: start=0, step=1, limit=4
  $region2: #{tpu_custom_call.1} parent=0 // loop_pre_header
    _
  $region3: #{tpu_custom_call.1} parent=0 // loop_header
    %s10 = sphi 0, %s14
    %p11 = scmp.ge.s32.totalorder %s10, 4
    %s17 = sphi 0, %s36
    %s18 = sphi 0, %s32
    %s19 = sphi 0, %s28
    %s20 = sphi 0, %s17
    %s21 = sphi 0, %s18
    %s22 = sphi 0, %s19
    %s23 = sphi 0, %s20
    %s24 = sphi 0, %s21
    %s25 = sphi 0, %s22
    %s41 = sphi 0, %s43
    %s44 = sphi 0, %s41
    %s45 = sphi 0, %s44
    %s61 = sphi 0, %s45
    %s73 = sphi 0, %s75
    %s76 = sphi 0, %s73
    %s77 = sphi 0, %s76
    %s93 = sphi 0, %s77
    %s97 = sphi 0, %s97
    %s99 = sphi 0, %s97
    %s100 = sphi 0, %s99
    %s114 = sphi 0, %s100
    %s118 = sphi 0, %s118
    %s120 = sphi 0, %s118
    %s121 = sphi 0, %s120
    %s135 = sphi 0, %s121
    %s143 = sphi 0, %s145
    %s146 = sphi 0, %s143
    %s147 = sphi 0, %s146
    %s163 = sphi 0, %s147
  $region4: #{tpu_custom_call.1} parent=0 // loop_header_branch
    %13 = sbr.rel (%p11) target = $region8
  $region5: #{tpu_custom_call.1} parent=0 // loop_body
    %s15 = ssub.s32 %s10, 1
    %s16 = ssub.s32 %s10, 2
    %s26 = sadd.s32 1, %s19
    %p27 = scmp.ge.s32.totalorder %s26, 1
    %s28 = scalar_select %p27, 0, %s26
    %s29 = sadd.s32 1, %s18
    %s30 = scalar_select %p27, %s29, %s18
    %p31 = scmp.ge.s32.totalorder %s30, 1
    %s32 = scalar_select %p31, 0, %s30
    %s33 = sadd.s32 1, %s17
    %s34 = scalar_select %p31, %s33, %s17
    %p35 = scmp.ge.s32.totalorder %s34, 2
    %s36 = scalar_select %p35, 0, %s34
    %s37 = ssub.s32 %s17, %s36
    %s38 = ssub.s32 %s18, %s32
    %s39 = sor.u32 %s37, %s38
    %p40 = scmp.eq.s32.totalorder %s39, 0
    %s42 = sadd.s32 %s41, 1
    %s43 = scalar_select %p40, %s41, %s42
    %p46 = pneg %p40
    %p47 = scmp.eq.s32.totalorder %s10, 1
    %p48 = por %p46, %p47
    %p49 = scmp.ne.s32.totalorder %s41, %s44
    %p50 = scmp.eq.s32.totalorder %s10, 0
    %p51 = por %p49, %p50
    %p52 = scmp.ne.s32.totalorder %s41, %s44
    %p53 = scmp.eq.s32.totalorder %s15, 1
    %p54 = por %p52, %p53
    %p55 = scmp.ne.s32.totalorder %s44, %s45
    %p56 = scmp.eq.s32.totalorder %s15, 0
    %p57 = por %p55, %p56
    %p58 = scmp.ne.s32.totalorder %s44, %s45
    %p59 = scmp.eq.s32.totalorder %s16, 1
    %p60 = por %p58, %p59
    %p62 = scmp.ne.s32.totalorder %s45, %s61
    %p63 = scmp.eq.s32.totalorder %s16, 0
    %p64 = por %p62, %p63
    %p65 = scmp.lt.s32.totalorder %s19, %s18
    %s66 = scalar_select %p65, %s19, %s18
    %p67 = scmp.lt.s32.totalorder %s28, %s32
    %s68 = scalar_select %p67, %s28, %s32
    %s69 = ssub.s32 %s17, %s36
    %s70 = ssub.s32 %s66, %s68
    %s71 = sor.u32 %s69, %s70
    %p72 = scmp.eq.s32.totalorder %s71, 0
    %s74 = sadd.s32 %s73, 1
    %s75 = scalar_select %p72, %s73, %s74
    %p78 = pneg %p72
    %p79 = scmp.eq.s32.totalorder %s10, 1
    %p80 = por %p78, %p79
    %p81 = scmp.ne.s32.totalorder %s73, %s76
    %p82 = scmp.eq.s32.totalorder %s10, 0
    %p83 = por %p81, %p82
    %p84 = scmp.ne.s32.totalorder %s73, %s76
    %p85 = scmp.eq.s32.totalorder %s15, 1
    %p86 = por %p84, %p85
    %p87 = scmp.ne.s32.totalorder %s76, %s77
    %p88 = scmp.eq.s32.totalorder %s15, 0
    %p89 = por %p87, %p88
    %p90 = scmp.ne.s32.totalorder %s76, %s77
    %p91 = scmp.eq.s32.totalorder %s16, 1
    %p92 = por %p90, %p91
    %p94 = scmp.ne.s32.totalorder %s77, %s93
    %p95 = scmp.eq.s32.totalorder %s16, 0
    %p96 = por %p94, %p95
    %s98 = sadd.s32 %s97, 1
    %p101 = scmp.eq.s32.totalorder %s10, 1
    %p102 = scmp.ne.s32.totalorder %s97, %s99
    %p103 = scmp.eq.s32.totalorder %s10, 0
    %p104 = por %p102, %p103
    %p105 = scmp.ne.s32.totalorder %s97, %s99
    %p106 = scmp.eq.s32.totalorder %s15, 1
    %p107 = por %p105, %p106
    %p108 = scmp.ne.s32.totalorder %s99, %s100
    %p109 = scmp.eq.s32.totalorder %s15, 0
    %p110 = por %p108, %p109
    %p111 = scmp.ne.s32.totalorder %s99, %s100
    %p112 = scmp.eq.s32.totalorder %s16, 1
    %p113 = por %p111, %p112
    %p115 = scmp.ne.s32.totalorder %s100, %s114
    %p116 = scmp.eq.s32.totalorder %s16, 0
    %p117 = por %p115, %p116
    %s119 = sadd.s32 %s118, 1
    %p122 = scmp.eq.s32.totalorder %s10, 1
    %p123 = scmp.ne.s32.totalorder %s118, %s120
    %p124 = scmp.eq.s32.totalorder %s10, 0
    %p125 = por %p123, %p124
    %p126 = scmp.ne.s32.totalorder %s118, %s120
    %p127 = scmp.eq.s32.totalorder %s15, 1
    %p128 = por %p126, %p127
    %p129 = scmp.ne.s32.totalorder %s120, %s121
    %p130 = scmp.eq.s32.totalorder %s15, 0
    %p131 = por %p129, %p130
    %p132 = scmp.ne.s32.totalorder %s120, %s121
    %p133 = scmp.eq.s32.totalorder %s16, 1
    %p134 = por %p132, %p133
    %p136 = scmp.ne.s32.totalorder %s121, %s135
    %p137 = scmp.eq.s32.totalorder %s16, 0
    %p138 = por %p136, %p137
    %s139 = ssub.s32 %s17, %s36
    %s140 = ssub.s32 %s18, %s32
    %s141 = sor.u32 %s139, %s140
    %p142 = scmp.eq.s32.totalorder %s141, 0
    %s144 = sadd.s32 %s143, 1
    %s145 = scalar_select %p142, %s143, %s144
    %p148 = pneg %p142
    %p149 = scmp.eq.s32.totalorder %s10, 1
    %p150 = por %p148, %p149
    %p151 = scmp.ne.s32.totalorder %s143, %s146
    %p152 = scmp.eq.s32.totalorder %s10, 0
    %p153 = por %p151, %p152
    %p154 = scmp.ne.s32.totalorder %s143, %s146
    %p155 = scmp.eq.s32.totalorder %s15, 1
    %p156 = por %p154, %p155
    %p157 = scmp.ne.s32.totalorder %s146, %s147
    %p158 = scmp.eq.s32.totalorder %s15, 0
    %p159 = por %p157, %p158
    %p160 = scmp.ne.s32.totalorder %s146, %s147
    %p161 = scmp.eq.s32.totalorder %s16, 1
    %p162 = por %p160, %p161
    %p164 = scmp.ne.s32.totalorder %s147, %s163
    %p165 = scmp.eq.s32.totalorder %s16, 0
    %p166 = por %p164, %p165
    %p167 = scmp.le.s32.totalorder 1, %s10
    %p168 = scmp.lt.s32.totalorder %s10, 3
    %p169 = pnand %p167, %p168
    %p170 = pneg %p169
    // Predicated region
    $region9: #{tpu_custom_call.1} parent=5 // pred_check
      _
    $region10: #{tpu_custom_call.1} parent=5 // pred_check_branch
      %172 = sbr.rel (%p169) target = $region12
    $region11: #{tpu_custom_call.1} parent=5 // pred_region
      %s173 = ssub.s32 %s10, 1
      // Predicated region
      $region13: #{tpu_custom_call.1} parent=11 // pred_check
        %p174 = pneg %p110
      $region14: #{tpu_custom_call.1} parent=11 // pred_check_branch
        %176 = sbr.rel (%p174) target = $region16
      $region15: #{tpu_custom_call.1} parent=11 // pred_region
        _
      $region16: #{tpu_custom_call.1} parent=11 // pred_fallthru
        _
      // Predicated region
      $region17: #{tpu_custom_call.1} parent=11 // pred_check
        %p177 = pneg %p131
      $region18: #{tpu_custom_call.1} parent=11 // pred_check_branch
        %179 = sbr.rel (%p177) target = $region20
      $region19: #{tpu_custom_call.1} parent=11 // pred_region
        _
      $region20: #{tpu_custom_call.1} parent=11 // pred_fallthru
        _
    $region12: #{tpu_custom_call.1} parent=5 // pred_fallthru
      _
    %p180 = scmp.lt.s32.totalorder %s10, 2
    // Predicated region
    $region21: #{tpu_custom_call.1} parent=5 // pred_check
      %p181 = pneg %p180
    $region22: #{tpu_custom_call.1} parent=5 // pred_check_branch
      %183 = sbr.rel (%p181) target = $region24
    $region23: #{tpu_custom_call.1} parent=5 // pred_region
      // Predicated region
      $region25: #{tpu_custom_call.1} parent=23 // pred_check
        %p184 = pneg %p51
      $region26: #{tpu_custom_call.1} parent=23 // pred_check_branch
        %186 = sbr.rel (%p184) target = $region28
      $region27: #{tpu_custom_call.1} parent=23 // pred_region
        %p187 = scmp.lt.s32.totalorder %s17, 1
        %s188 = scalar_select %p187, %s17, 1
        %p189 = scmp.lt.s32.totalorder %s18, 0
        %s190 = scalar_select %p189, %s18, 0
        %s191 = sadd.s32 %s190, %s188
        %s192 = smul.addr %s191, 4
        %s193 = scalar_lea.vmem %s0, %s192
      $region28: #{tpu_custom_call.1} parent=23 // pred_fallthru
        _
      // Predicated region
      $region29: #{tpu_custom_call.1} parent=23 // pred_check
        %p194 = pneg %p83
      $region30: #{tpu_custom_call.1} parent=23 // pred_check_branch
        %196 = sbr.rel (%p194) target = $region32
      $region31: #{tpu_custom_call.1} parent=23 // pred_region
        %p197 = scmp.lt.s32.totalorder %s19, %s18
        %s198 = scalar_select %p197, %s19, %s18
        %p199 = scmp.lt.s32.totalorder %s17, 1
        %s200 = scalar_select %p199, %s17, 1
        %p201 = scmp.lt.s32.totalorder %s198, 0
        %s202 = scalar_select %p201, %s198, 0
        %s203 = sadd.s32 %s202, %s200
        %s204 = smul.addr %s203, 4
        %s205 = scalar_lea.vmem %s1, %s204
        %p206 = scmp.lt.s32.totalorder %s19, %s18
        %s207 = scalar_select %p206, %s19, %s18
      $region32: #{tpu_custom_call.1} parent=23 // pred_fallthru
        _
    $region24: #{tpu_custom_call.1} parent=5 // pred_fallthru
      _
    %p208 = scmp.le.s32.totalorder 1, %s10
    %p209 = scmp.lt.s32.totalorder %s10, 3
    %p210 = pnand %p208, %p209
    %p211 = pneg %p210
    // Predicated region
    $region33: #{tpu_custom_call.1} parent=5 // pred_check
      _
    $region34: #{tpu_custom_call.1} parent=5 // pred_check_branch
      %213 = sbr.rel (%p210) target = $region36
    $region35: #{tpu_custom_call.1} parent=5 // pred_region
      %s214 = ssub.s32 %s10, 1
      %p215 = scmp.lt.s32.totalorder %s20, 1
      %s216 = scalar_select %p215, %s20, 1
      %p217 = scmp.lt.s32.totalorder %s21, 0
      %s218 = scalar_select %p217, %s21, 0
      %s219 = sadd.s32 %s218, %s216
      %s220 = smul.addr %s219, 4
      %s221 = scalar_lea.vmem %s0, %s220
      %p222 = pneg %p57
      %p223 = pneg %p54
      %p224 = scmp.lt.s32.totalorder %s22, %s21
      %s225 = scalar_select %p224, %s22, %s21
      %p226 = scmp.lt.s32.totalorder %s20, 1
      %s227 = scalar_select %p226, %s20, 1
      %p228 = scmp.lt.s32.totalorder %s225, 0
      %s229 = scalar_select %p228, %s225, 0
      %s230 = sadd.s32 %s229, %s227
      %s231 = smul.addr %s230, 4
      %s232 = scalar_lea.vmem %s1, %s231
      %p233 = pneg %p89
      %p234 = pneg %p86
      %p235 = pneg %p110
      %p236 = pneg %p107
      %p237 = pneg %p131
      %p238 = pneg %p128
      %p239 = pneg %p159
      %p240 = pneg %p156
      %p241 = scmp.lt.s32.totalorder %s20, 1
      %s242 = scalar_select %p241, %s20, 1
      %p243 = scmp.lt.s32.totalorder %s21, 0
      %s244 = scalar_select %p243, %s21, 0
      %s245 = sadd.s32 %s244, %s242
      %s246 = smul.addr %s245, 8
      %s247 = scalar_lea.vmem %s4, %s246
      %p248 = scmp.lt.s32.totalorder %s20, 1
      %s249 = scalar_select %p248, %s20, 1
      %p250 = scmp.lt.s32.totalorder %s21, 0
      %s251 = scalar_select %p250, %s21, 0
      %s252 = sadd.s32 %s251, %s249
      %s253 = smul.addr %s252, 4
      %s254 = scalar_lea.vmem %s0, %s253
      %p255 = scmp.lt.s32.totalorder %s22, %s21
      %s256 = scalar_select %p255, %s22, %s21
      %p257 = scmp.lt.s32.totalorder %s20, 1
      %s258 = scalar_select %p257, %s20, 1
      %p259 = scmp.lt.s32.totalorder %s256, 0
      %s260 = scalar_select %p259, %s256, 0
      %s261 = sadd.s32 %s260, %s258
      %s262 = smul.addr %s261, 4
      %s263 = scalar_lea.vmem %s1, %s262
      %p264 = scmp.lt.s32.totalorder %s22, %s21
      %s265 = scalar_select %p264, %s22, %s21
      %p266 = scmp.lt.s32.totalorder %s20, 1
      %s267 = scalar_select %p266, %s20, 1
      %p268 = scmp.lt.s32.totalorder %s21, 0
      %s269 = scalar_select %p268, %s21, 0
      %s270 = sadd.s32 %s269, %s267
      %s271 = smul.addr %s270, 8
      %s272 = scalar_lea.vmem %s4, %s271
      %p274 = scmp.eq.s32.totalorder %s22, 0
      // Predicated region
      $region37: #{tpu_custom_call.1} parent=35 // pred_check
        %p275 = pneg %p274
      $region38: #{tpu_custom_call.1} parent=35 // pred_check_branch
        %277 = sbr.rel (%p275) target = $region40
      $region39: #{tpu_custom_call.1} parent=35 // pred_region
        %v278 = vld [vmem:[%s254] sm:$0x7]
        %v279 = vld [vmem:[%s2] sm:$0x3]
        %vm280 = vcmask 23552
        %v282 = vsel %vm280, %v278, 0
        %vm284 = vcmask 1040384
        %vm285 = vcmask 1041408
        %v286 = vsel %vm284, 4294967295, 65535
        %v287 = vsel %vm285, %v286, 0
        %v289 = vand.u32 %v279, %v287
        %291 = vmatprep.subr.bf16.mxu0 0
        %292 = vmatpush1.bf16.msra.mxu0 %v289
        %293 = vmatprep.subr.bf16.mxu0 0
        %294 = vmatpush1.bf16.msra.mxu0 0
        %295 = vmatprep.subr.bf16.mxu0 0
        %296 = vmatpush1.bf16.msra.mxu0 0
        %297 = vmatprep.subr.bf16.mxu0 0
        %298 = vmatpush1.bf16.msra.mxu0 0
        %299 = vmatprep.subr.bf16.mxu0 0
        %300 = vmatpush1.bf16.msra.mxu0 0
        %301 = vmatprep.subr.bf16.mxu0 0
        %302 = vmatpush1.bf16.msra.mxu0 0
        %303 = vmatprep.subr.bf16.mxu0 0
        %304 = vmatpush1.bf16.msra.mxu0 0
        %305 = vmatprep.subr.bf16.mxu0 0
        %306 = vmatpush1.bf16.msra.mxu0 0
        %307 = vmatprep.subr.bf16.mxu0 0
        %308 = vmatpush1.bf16.msra.mxu0 0
        %309 = vmatprep.subr.bf16.mxu0 0
        %310 = vmatpush1.bf16.msra.mxu0 0
        %311 = vmatprep.subr.bf16.mxu0 0
        %312 = vmatpush1.bf16.msra.mxu0 0
        %313 = vmatprep.subr.bf16.mxu0 0
        %314 = vmatpush1.bf16.msra.mxu0 0
        %315 = vmatprep.subr.bf16.mxu0 0
        %316 = vmatpush1.bf16.msra.mxu0 0
        %317 = vmatprep.subr.bf16.mxu0 0
        %318 = vmatpush1.bf16.msra.mxu0 0
        %319 = vmatprep.subr.bf16.mxu0 0
        %320 = vmatpush1.bf16.msra.mxu0 0
        %321 = vmatprep.subr.bf16.mxu0 0
        %322 = vmatpush1.bf16.msra.mxu0 0
        %323 = vmatprep.mubr.bf16.mxu0 0
        %324 = vmatmul.mubr.bf16.gmra.mrb[0].mxu0 %v282
        %v325 = vpop.f32.mrb[0].mxu0
        %v326 = vadd.f32 0.0, %v325
        %v327 = vpop.f32.mrb[0].mxu0
        %v328 = vpop.f32.mrb[0].mxu0
        %v329 = vpop.f32.mrb[0].mxu0
        %330 = vdwg.mxu0
        %v331 = vpack.c.bf16 %v326, %v326
        %332 = vst [vmem:[#allocation2] sm:$0x7] %v331
        %vm333 = vcmask 5120
        %334 = vst.msk [vmem:[#allocation3] sm:$0x3f] %vm333, -inf
        %335 = vst.msk [vmem:[#allocation4] sm:$0x3f] %vm333, 0.0
        %336 = vst [vmem:[#allocation5] sm:$0x3f] 0.0
      $region40: #{tpu_custom_call.1} parent=35 // pred_fallthru
        _
      %p337 = scmp.le.s32.totalorder %s22, %s21
      // Predicated region
      $region41: #{tpu_custom_call.1} parent=35 // pred_check
        %p338 = pneg %p337
      $region42: #{tpu_custom_call.1} parent=35 // pred_check_branch
        %340 = sbr.rel (%p338) target = $region44
      $region43: #{tpu_custom_call.1} parent=35 // pred_region
        %v341 = vld [vmem:[%s263] sm:$0x7]
        %v342 = vld [vmem:[%s3] sm:$0xf]
        %v345 = vunpack.c.l.s4 1983009808
        %v346 = vunpack.c.0.s8 %v345
        %v347 = vlaneseq
        %v348 = vshrl.u32 %v347, 7
        %v349 = vsub.s32 %v346, %v348
        %v350 = vrot.slane %v342, %v349
        %v351 = vcombine.high %v350, %v350
        %vm352 = vcmask 23552
        %v354 = vsel %vm352, %v341, 0
        %vm356 = vcmask 1040384
        %vm357 = vcmask 1041408
        %v358 = vsel %vm356, 4294967295, 65535
        %v359 = vsel %vm357, %v358, 0
        %v361 = vand.u32 %v350, %v359
        %v364 = vand.u32 %v351, %v359
        %366 = vmatprep.subr.bf16.mxu0 %v364
        %367 = vmatpush1.bf16.msra.mxu0 %v361
        %368 = vmatprep.subr.bf16.mxu0 0
        %369 = vmatpush1.bf16.msra.mxu0 0
        %370 = vmatprep.subr.bf16.mxu0 0
        %371 = vmatpush1.bf16.msra.mxu0 0
        %372 = vmatprep.subr.bf16.mxu0 0
        %373 = vmatpush1.bf16.msra.mxu0 0
        %374 = vmatprep.subr.bf16.mxu0 0
        %375 = vmatpush1.bf16.msra.mxu0 0
        %376 = vmatprep.subr.bf16.mxu0 0
        %377 = vmatpush1.bf16.msra.mxu0 0
        %378 = vmatprep.subr.bf16.mxu0 0
        %379 = vmatpush1.bf16.msra.mxu0 0
        %380 = vmatprep.subr.bf16.mxu0 0
        %381 = vmatpush1.bf16.msra.mxu0 0
        %382 = vmatprep.subr.bf16.mxu0 0
        %383 = vmatpush1.bf16.msra.mxu0 0
        %384 = vmatprep.subr.bf16.mxu0 0
        %385 = vmatpush1.bf16.msra.mxu0 0
        %386 = vmatprep.subr.bf16.mxu0 0
        %387 = vmatpush1.bf16.msra.mxu0 0
        %388 = vmatprep.subr.bf16.mxu0 0
        %389 = vmatpush1.bf16.msra.mxu0 0
        %390 = vmatprep.subr.bf16.mxu0 0
        %391 = vmatpush1.bf16.msra.mxu0 0
        %392 = vmatprep.subr.bf16.mxu0 0
        %393 = vmatpush1.bf16.msra.mxu0 0
        %394 = vmatprep.subr.bf16.mxu0 0
        %395 = vmatpush1.bf16.msra.mxu0 0
        %396 = vmatprep.subr.bf16.mxu0 0
        %397 = vmatpush1.bf16.msra.mxu0 0
        %398 = vmatprep.mubr.bf16.mxu0 0
        %399 = vmatmul.mubr.bf16.gmra.mrb[0].mxu0 %v354
        %v400 = vpop.f32.mrb[0].mxu0
        %v401 = vadd.f32 0.0, %v400
        %v402 = vpop.f32.mrb[0].mxu0
        %v403 = vadd.f32 0.0, %v402
        %v404 = vpop.f32.mrb[0].mxu0
        %v405 = vpop.f32.mrb[0].mxu0
        %406 = vdwg.mxu0
        %v407 = vpack.c.bf16 %v401, %v401
        %v408 = vpack.c.bf16 %v403, %v403
        %v409 = vld [vmem:[#allocation2] sm:$0x7]
        %410 = vmatprep.subr.bf16.mxu0 0
        %411 = vmatpush1.bf16.xpose.msra.mxu0 %v407
        %412 = vmatprep.subr.bf16.mxu0 0
        %413 = vmatpush1.bf16.xpose.msra.mxu0 0
        %414 = vmatprep.subr.bf16.mxu0 0
        %415 = vmatpush1.bf16.xpose.msra.mxu0 0
        %416 = vmatprep.subr.bf16.mxu0 0
        %417 = vmatpush1.bf16.xpose.msra.mxu0 0
        %418 = vmatprep.subr.bf16.mxu0 0
        %419 = vmatpush1.bf16.xpose.msra.mxu0 0
        %420 = vmatprep.subr.bf16.mxu0 0
        %421 = vmatpush1.bf16.xpose.msra.mxu0 0
        %422 = vmatprep.subr.bf16.mxu0 0
        %423 = vmatpush1.bf16.xpose.msra.mxu0 0
        %424 = vmatprep.subr.bf16.mxu0 0
        %425 = vmatpush1.bf16.xpose.msra.mxu0 0
        %426 = vmatprep.subr.bf16.mxu0 0
        %427 = vmatpush1.bf16.xpose.msra.mxu0 0
        %428 = vmatprep.subr.bf16.mxu0 0
        %429 = vmatpush1.bf16.xpose.msra.mxu0 0
        %430 = vmatprep.subr.bf16.mxu0 0
        %431 = vmatpush1.bf16.xpose.msra.mxu0 0
        %432 = vmatprep.subr.bf16.mxu0 0
        %433 = vmatpush1.bf16.xpose.msra.mxu0 0
        %434 = vmatprep.subr.bf16.mxu0 0
        %435 = vmatpush1.bf16.xpose.msra.mxu0 0
        %436 = vmatprep.subr.bf16.mxu0 0
        %437 = vmatpush1.bf16.xpose.msra.mxu0 0
        %438 = vmatprep.subr.bf16.mxu0 0
        %439 = vmatpush1.bf16.xpose.msra.mxu0 0
        %440 = vmatprep.subr.bf16.mxu0 0
        %441 = vmatpush1.bf16.xpose.msra.mxu0 0
        %442 = vmatprep.mubr.bf16.mxu0 0
        %443 = vmatmul.mubr.bf16.gmra.mrb[0].mxu0 %v409
        %v444 = vpop.f32.mrb[0].mxu0
        %v445 = vadd.f32 0.0, %v444
        %v446 = vpop.f32.mrb[0].mxu0
        %v447 = vpop.f32.mrb[0].mxu0
        %v448 = vpop.f32.mrb[0].mxu0
        %449 = vdwg.mxu0
        %p450 = scmp.eq.s32.totalorder %s22, %s21
        // Predicated region
        $region45: #{tpu_custom_call.1} parent=43 // pred_check
          %p451 = pneg %p450
        $region46: #{tpu_custom_call.1} parent=43 // pred_check_branch
          %453 = sbr.rel (%p451) target = $region48
        $region47: #{tpu_custom_call.1} parent=43 // pred_region
          %v454 = vlaneseq
          %v455 = vshrl.u32 %v454, 7
          %v456 = vlaneseq
          %v457 = vand.u32 %v456, 127
          %vm458 = vcmp.gt.s32.totalorder %v457, %v455
          %v459 = vsel %vm458, -inf, %v445
          %v460 = vld [vmem:[#allocation3] sm:$0x3f]
          %vm461 = vcmask 46080
          %v462 = vsel %vm461, %v459, -inf
          %463 = vmax.xlane.f32.xlu0 %v462
          %v464 = vpop.xlane.xlu0 %463
          %v465 = vmax.f32 %v460, %v464
          %v466 = vsub.f32 %v460, %v465
          %v467 = vmul.f32 %v466, 1.442695
          %v468 = vpow.pop %v467
          %470 = vset.pattern.permute.xlu0 0
          %471 = vperm.xlu0 %470, %v465
          %v472 = vpop.permute.xlu0 %471
          %v474 = vsub.f32 %v459, %v472
          %v475 = vmul.f32 %v474, 1.442695
          %v476 = vpow.pop %v475
          %v477 = vld [vmem:[#allocation4] sm:$0x3f]
          %v478 = vmul.f32 %v468, %v477
          %v479 = vsel %vm461, %v476, 0.0
          %480 = vadd.xlane.f32.xlu0 %v479
          %v481 = vpop.xlane.xlu0 %480
          %v482 = vadd.f32 %v478, %v481
          %vm483 = vcmask 5120
          %484 = vst.msk [vmem:[#allocation4] sm:$0x3f] %vm483, %v482
          %v485 = vld [vmem:[#allocation5] sm:$0x3f]
          %487 = vset.pattern.permute.xlu0 0
          %488 = vperm.xlu0 %487, %v468
          %v489 = vpop.permute.xlu0 %488
          %v491 = vmul.f32 %v489, %v485
          %v492 = vpack.c.bf16 %v476, %v476
          %vm493 = vcmask 48128
          %v495 = vsel %vm493, %v492, 0
          %vm497 = vcmask 1042432
          %v499 = vsel %vm497, %v408, 0
          %501 = vmatprep.subr.bf16.mxu0 0
          %502 = vmatpush1.bf16.msra.mxu0 %v499
          %503 = vmatprep.subr.bf16.mxu0 0
          %504 = vmatpush1.bf16.msra.mxu0 0
          %505 = vmatprep.subr.bf16.mxu0 0
          %506 = vmatpush1.bf16.msra.mxu0 0
          %507 = vmatprep.subr.bf16.mxu0 0
          %508 = vmatpush1.bf16.msra.mxu0 0
          %509 = vmatprep.subr.bf16.mxu0 0
          %510 = vmatpush1.bf16.msra.mxu0 0
          %511 = vmatprep.subr.bf16.mxu0 0
          %512 = vmatpush1.bf16.msra.mxu0 0
          %513 = vmatprep.subr.bf16.mxu0 0
          %514 = vmatpush1.bf16.msra.mxu0 0
          %515 = vmatprep.subr.bf16.mxu0 0
          %516 = vmatpush1.bf16.msra.mxu0 0
          %517 = vmatprep.subr.bf16.mxu0 0
          %518 = vmatpush1.bf16.msra.mxu0 0
          %519 = vmatprep.subr.bf16.mxu0 0
          %520 = vmatpush1.bf16.msra.mxu0 0
          %521 = vmatprep.subr.bf16.mxu0 0
          %522 = vmatpush1.bf16.msra.mxu0 0
          %523 = vmatprep.subr.bf16.mxu0 0
          %524 = vmatpush1.bf16.msra.mxu0 0
          %525 = vmatprep.subr.bf16.mxu0 0
          %526 = vmatpush1.bf16.msra.mxu0 0
          %527 = vmatprep.subr.bf16.mxu0 0
          %528 = vmatpush1.bf16.msra.mxu0 0
          %529 = vmatprep.subr.bf16.mxu0 0
          %530 = vmatpush1.bf16.msra.mxu0 0
          %531 = vmatprep.subr.bf16.mxu0 0
          %532 = vmatpush1.bf16.msra.mxu0 0
          %533 = vmatprep.mubr.bf16.mxu0 0
          %534 = vmatmul.mubr.bf16.gmra.mrb[0].mxu0 %v495
          %v535 = vpop.f32.mrb[0].mxu0
          %v536 = vadd.f32 0.0, %v535
          %v537 = vpop.f32.mrb[0].mxu0
          %v538 = vpop.f32.mrb[0].mxu0
          %v539 = vpop.f32.mrb[0].mxu0
          %540 = vdwg.mxu0
          %v541 = vadd.f32 %v491, %v536
          %542 = vst [vmem:[#allocation5] sm:$0x3f] %v541
          %543 = vst.msk [vmem:[#allocation3] sm:$0x3f] %vm483, %v465
        $region48: #{tpu_custom_call.1} parent=43 // pred_fallthru
          _
        %p544 = scmp.lt.s32.totalorder %s22, %s21
        // Predicated region
        $region49: #{tpu_custom_call.1} parent=43 // pred_check
          %p545 = pneg %p544
        $region50: #{tpu_custom_call.1} parent=43 // pred_check_branch
          %547 = sbr.rel (%p545) target = $region52
        $region51: #{tpu_custom_call.1} parent=43 // pred_region
          %v548 = vld [vmem:[#allocation3] sm:$0x3f]
          %vm549 = vcmask 46080
          %v550 = vsel %vm549, %v445, -inf
          %551 = vmax.xlane.f32.xlu0 %v550
          %v552 = vpop.xlane.xlu0 %551
          %v553 = vmax.f32 %v548, %v552
          %v554 = vsub.f32 %v548, %v553
          %v555 = vmul.f32 %v554, 1.442695
          %v556 = vpow.pop %v555
          %558 = vset.pattern.permute.xlu0 0
          %559 = vperm.xlu0 %558, %v553
          %v560 = vpop.permute.xlu0 %559
          %v562 = vsub.f32 %v445, %v560
          %v563 = vmul.f32 %v562, 1.442695
          %v564 = vpow.pop %v563
          %v565 = vld [vmem:[#allocation4] sm:$0x3f]
          %v566 = vmul.f32 %v556, %v565
          %v567 = vsel %vm549, %v564, 0.0
          %568 = vadd.xlane.f32.xlu0 %v567
          %v569 = vpop.xlane.xlu0 %568
          %v570 = vadd.f32 %v566, %v569
          %vm571 = vcmask 5120
          %572 = vst.msk [vmem:[#allocation4] sm:$0x3f] %vm571, %v570
          %v573 = vld [vmem:[#allocation5] sm:$0x3f]
          %575 = vset.pattern.permute.xlu0 0
          %576 = vperm.xlu0 %575, %v556
          %v577 = vpop.permute.xlu0 %576
          %v579 = vmul.f32 %v577, %v573
          %v580 = vpack.c.bf16 %v564, %v564
          %vm581 = vcmask 48128
          %v583 = vsel %vm581, %v580, 0
          %vm585 = vcmask 1042432
          %v587 = vsel %vm585, %v408, 0
          %589 = vmatprep.subr.bf16.mxu0 0
          %590 = vmatpush1.bf16.msra.mxu0 %v587
          %591 = vmatprep.subr.bf16.mxu0 0
          %592 = vmatpush1.bf16.msra.mxu0 0
          %593 = vmatprep.subr.bf16.mxu0 0
          %594 = vmatpush1.bf16.msra.mxu0 0
          %595 = vmatprep.subr.bf16.mxu0 0
          %596 = vmatpush1.bf16.msra.mxu0 0
          %597 = vmatprep.subr.bf16.mxu0 0
          %598 = vmatpush1.bf16.msra.mxu0 0
          %599 = vmatprep.subr.bf16.mxu0 0
          %600 = vmatpush1.bf16.msra.mxu0 0
          %601 = vmatprep.subr.bf16.mxu0 0
          %602 = vmatpush1.bf16.msra.mxu0 0
          %603 = vmatprep.subr.bf16.mxu0 0
          %604 = vmatpush1.bf16.msra.mxu0 0
          %605 = vmatprep.subr.bf16.mxu0 0
          %606 = vmatpush1.bf16.msra.mxu0 0
          %607 = vmatprep.subr.bf16.mxu0 0
          %608 = vmatpush1.bf16.msra.mxu0 0
          %609 = vmatprep.subr.bf16.mxu0 0
          %610 = vmatpush1.bf16.msra.mxu0 0
          %611 = vmatprep.subr.bf16.mxu0 0
          %612 = vmatpush1.bf16.msra.mxu0 0
          %613 = vmatprep.subr.bf16.mxu0 0
          %614 = vmatpush1.bf16.msra.mxu0 0
          %615 = vmatprep.subr.bf16.mxu0 0
          %616 = vmatpush1.bf16.msra.mxu0 0
          %617 = vmatprep.subr.bf16.mxu0 0
          %618 = vmatpush1.bf16.msra.mxu0 0
          %619 = vmatprep.subr.bf16.mxu0 0
          %620 = vmatpush1.bf16.msra.mxu0 0
          %621 = vmatprep.mubr.bf16.mxu0 0
          %622 = vmatmul.mubr.bf16.gmra.mrb[0].mxu0 %v583
          %v623 = vpop.f32.mrb[0].mxu0
          %v624 = vadd.f32 0.0, %v623
          %v625 = vpop.f32.mrb[0].mxu0
          %v626 = vpop.f32.mrb[0].mxu0
          %v627 = vpop.f32.mrb[0].mxu0
          %628 = vdwg.mxu0
          %v629 = vadd.f32 %v579, %v624
          %630 = vst [vmem:[#allocation5] sm:$0x3f] %v629
          %631 = vst.msk [vmem:[#allocation3] sm:$0x3f] %vm571, %v553
        $region52: #{tpu_custom_call.1} parent=43 // pred_fallthru
          _
      $region44: #{tpu_custom_call.1} parent=35 // pred_fallthru
        _
      // Predicated region
      $region53: #{tpu_custom_call.1} parent=35 // pred_check
        %p632 = pneg %p274
      $region54: #{tpu_custom_call.1} parent=35 // pred_check_branch
        %634 = sbr.rel (%p632) target = $region56
      $region55: #{tpu_custom_call.1} parent=35 // pred_region
        %v635 = vld [vmem:[#allocation4] sm:$0x3f]
        %v636 = vrcp.pop %v635
        %v637 = vld [vmem:[#allocation5] sm:$0x3f]
        %639 = vset.pattern.permute.xlu0 0
        %640 = vperm.xlu0 %639, %v636
        %v641 = vpop.permute.xlu0 %640
        %v643 = vmul.f32 %v637, %v641
        %644 = vst [vmem:[%s272] sm:$0x3f] %v643
      $region56: #{tpu_custom_call.1} parent=35 // pred_fallthru
        _
      %p645 = scmp.lt.s32.totalorder %s20, 1
      %s646 = scalar_select %p645, %s20, 1
      %p647 = scmp.lt.s32.totalorder %s21, 0
      %s648 = scalar_select %p647, %s21, 0
      %s649 = sadd.s32 %s648, %s646
      %s650 = smul.addr %s649, 8
      %s651 = scalar_lea.vmem %s4, %s650
      // Predicated region
      $region57: #{tpu_custom_call.1} parent=35 // pred_check
        %p652 = pneg %p156
      $region58: #{tpu_custom_call.1} parent=35 // pred_check_branch
        %654 = sbr.rel (%p652) target = $region60
      $region59: #{tpu_custom_call.1} parent=35 // pred_region
        _
      $region60: #{tpu_custom_call.1} parent=35 // pred_fallthru
        _
    $region36: #{tpu_custom_call.1} parent=5 // pred_fallthru
      _
    %p655 = scmp.le.s32.totalorder 2, %s10
    // Predicated region
    $region61: #{tpu_custom_call.1} parent=5 // pred_check
      %p656 = pneg %p655
    $region62: #{tpu_custom_call.1} parent=5 // pred_check_branch
      %658 = sbr.rel (%p656) target = $region64
    $region63: #{tpu_custom_call.1} parent=5 // pred_region
      %s659 = ssub.s32 %s10, 2
      // Predicated region
      $region65: #{tpu_custom_call.1} parent=63 // pred_check
        %p660 = pneg %p162
      $region66: #{tpu_custom_call.1} parent=63 // pred_check_branch
        %662 = sbr.rel (%p660) target = $region68
      $region67: #{tpu_custom_call.1} parent=63 // pred_region
        %p663 = scmp.lt.s32.totalorder %s23, 1
        %s664 = scalar_select %p663, %s23, 1
        %p665 = scmp.lt.s32.totalorder %s24, 0
        %s666 = scalar_select %p665, %s24, 0
        %s667 = sadd.s32 %s666, %s664
        %s668 = smul.addr %s667, 8
        %s669 = scalar_lea.vmem %s4, %s668
      $region68: #{tpu_custom_call.1} parent=63 // pred_fallthru
        _
    $region64: #{tpu_custom_call.1} parent=5 // pred_fallthru
      _
  $region6: #{tpu_custom_call.1} parent=0 // loop_footer
    %s14 = sadd.s32 1, %s10
  $region7: #{tpu_custom_call.1} parent=0 // loop_footer_branch
    %9 = sbr.rel target = $region3
  $region8: #{tpu_custom_call.1} parent=0 // loop_exit
    _

</llo_original>
